<compile_context>
chip_gen: v5e
topology: v5e:2x2
jax: 0.10.0
libtpu: 0.0.40
codegen_flags: <defaults>
</compile_context>

<pallas_src>
import functools

import jax
import jax.numpy as jnp
from jax import lax
from jax.experimental import pallas as pl
from jax.experimental.pallas import tpu as pltpu


def _round_up(x: int, m: int) -> int:
    return ((x + m - 1) // m) * m


# ---------------------------------------------------------------------------
# Path A: tiny bf16 vocab -> table resident in VMEM, gather via one-hot matmul.
# ---------------------------------------------------------------------------
def _resident_kernel(idx_ref, w_ref, o_ref):
    # idx_ref: (TILE_T, 1) int32 token ids for this tile (VMEM).
    # w_ref:   (V, D_pad) full embedding table, resident across all grid steps.
    # o_ref:   (TILE_T, D_pad) dense output slab.
    idx = idx_ref[...]                                          # (T, 1)
    tile_t = idx.shape[0]
    vocab = w_ref.shape[0]
    col = lax.broadcasted_iota(jnp.int32, (tile_t, vocab), 1)   # (T, V)
    onehot = (idx == col).astype(w_ref.dtype)                   # exact 0/1 selector
    # bf16 x bf16 single MXU pass with f32 accumulation: exact for a 0/1 selector.
    o_ref[...] = jnp.dot(
        onehot, w_ref[...], preferred_element_type=jnp.float32
    ).astype(o_ref.dtype)


def _resident_lookup(idx_padded, weight, tile_t, vmem_limit):
    n_pad = idx_padded.shape[0]
    vocab, d_pad = weight.shape
    dsize = weight.dtype.itemsize
    cost = pl.CostEstimate(
        flops=2 * n_pad * vocab * d_pad,
        transcendentals=0,
        bytes_accessed=vocab * d_pad * dsize + n_pad * d_pad * dsize + n_pad * 4,
    )
    return pl.pallas_call(
        _resident_kernel,
        out_shape=jax.ShapeDtypeStruct((n_pad, d_pad), weight.dtype),
        grid_spec=pltpu.PrefetchScalarGridSpec(
            num_scalar_prefetch=0,
            grid=(n_pad // tile_t,),
            in_specs=[
                pl.BlockSpec((tile_t, 1), lambda i: (i, 0)),      # token ids
                pl.BlockSpec((vocab, d_pad), lambda i: (0, 0)),   # table: resident
            ],
            out_specs=pl.BlockSpec((tile_t, d_pad), lambda i: (i, 0)),
        ),
        compiler_params=pltpu.CompilerParams(
            dimension_semantics=("parallel",),
            vmem_limit_bytes=vmem_limit,
        ),
        cost_estimate=cost,
    )(idx_padded.reshape(n_pad, 1), weight)


# ---------------------------------------------------------------------------
# Path B: general path -> table stays un-padded in HBM, windowed row-DMA gather
#         directly into the output block.
# ---------------------------------------------------------------------------
def _gather_kernel(idx_ref, w_hbm, o_ref, sems, *, num_sems, tile_t, n_tokens):
    # idx_ref : (tile_t,) int32 token ids for this tile (SMEM).
    # w_hbm   : (V, D) full embedding table left in HBM (memory_space=pl.ANY).
    # o_ref   : (tile_t, D) output block; rows are DMA'd straight into it.
    # sems    : (num_sems,) DMA semaphores -> bounded in-flight window.
    base = pl.program_id(0) * tile_t

    def wait_slot(t):
        # Every row copy moves exactly D*dsize bytes, so a same-shaped
        # descriptor on the same semaphore performs the matching wait.
        pltpu.make_async_copy(
            w_hbm.at[pl.ds(0, 1), :],
            o_ref.at[pl.ds(t, 1), :],
            sems.at[t % num_sems],
        ).wait()

    @pl.loop(0, tile_t)
    def _(t):
        prev = t - num_sems

        # Before reusing a semaphore slot, retire the copy started num_sems
        # iterations ago (only if that row was actually issued).
        @pl.when(jnp.logical_and(prev >= 0, base + prev < n_tokens))
        def _():
            wait_slot(t)

        # Skip pad rows on the final tile (no wasted descriptors).
        @pl.when(base + t < n_tokens)
        def _():
            pltpu.make_async_copy(
                w_hbm.at[pl.ds(idx_ref[t], 1), :],
                o_ref.at[pl.ds(t, 1), :],
                sems.at[t % num_sems],
            ).start()

    # Drain the last window so every row landed before the block writes back.
    @pl.loop(tile_t - num_sems, tile_t)
    def _(t):
        @pl.when(base + t < n_tokens)
        def _():
            wait_slot(t)


def _hbm_gather_lookup(idx_padded, weight, tile_t, n_tokens, vmem_limit):
    n_pad = idx_padded.shape[0]
    _, d = weight.shape
    dsize = weight.dtype.itemsize
    num_sems = min(16, tile_t)
    cost = pl.CostEstimate(
        flops=0,
        transcendentals=0,
        bytes_accessed=(n_tokens + n_pad) * d * dsize + n_pad * 4,
    )
    kernel = functools.partial(
        _gather_kernel, num_sems=num_sems, tile_t=tile_t, n_tokens=n_tokens)
    return pl.pallas_call(
        kernel,
        out_shape=jax.ShapeDtypeStruct((n_pad, d), weight.dtype),
        grid_spec=pltpu.PrefetchScalarGridSpec(
            num_scalar_prefetch=0,
            grid=(n_pad // tile_t,),
            in_specs=[
                # Per-tile token ids streamed into SMEM (scales to any n_tokens).
                pl.BlockSpec((tile_t,), lambda i: (i,),
                             memory_space=pltpu.MemorySpace.SMEM),
                # Table stays in HBM; rows are gathered by manual DMA.
                pl.BlockSpec(memory_space=pl.ANY),
            ],
            out_specs=pl.BlockSpec((tile_t, d), lambda i: (i, 0)),
            scratch_shapes=[pltpu.SemaphoreType.DMA((num_sems,))],
        ),
        compiler_params=pltpu.CompilerParams(
            dimension_semantics=("parallel",),
            vmem_limit_bytes=vmem_limit,
        ),
        cost_estimate=cost,
    )(idx_padded, weight)


# ---------------------------------------------------------------------------
# Wrapper (jit-friendly): mirrors CustomEmbedding.forward semantics.
# ---------------------------------------------------------------------------
def embedding_lookup(input_indices: jax.Array, weight: jax.Array) -> jax.Array:
    if not jnp.issubdtype(input_indices.dtype, jnp.integer):
        raise TypeError("Input indices must be an integer tensor.")

    num_embeddings, embedding_dim = weight.shape
    orig_shape = input_indices.shape

    # TODO(synk): PyTorch raises IndexError on out-of-range indices; a
    # data-dependent raise is not expressible under jit, so indices are
    # clamped instead (also prevents OOB row DMAs inside the kernel).
    flat_idx = jnp.clip(
        input_indices.reshape(-1).astype(jnp.int32), 0, num_embeddings - 1
    )
    n_tokens = int(flat_idx.shape[0])
    if n_tokens == 0:
        return jnp.zeros(orig_shape + (embedding_dim,), weight.dtype)

    # Token tiling: 256-token tiles (grid overhead amortized, dense output
    # slabs), or one sublane-aligned tile for tiny inputs.
    tile_t = 256 if n_tokens >= 256 else _round_up(n_tokens, 16)
    n_pad = _round_up(n_tokens, tile_t)
    idx_padded = jnp.pad(flat_idx, (0, n_pad - n_tokens))   # pad ids (rows skipped)

    dsize = weight.dtype.itemsize
    try:
        vmem_cap = int(pltpu.get_tpu_info().vmem_capacity_bytes)
    except Exception:
        vmem_cap = 64 * 1024 * 1024          # conservative: v7x per-core VMEM
    # Leave Mosaic internal-scratch headroom; never request full physical VMEM.
    budget_cap = max(min(vmem_cap - 8 * 2**20, 56 * 2**20), 16 * 2**20)

    # Path A only for tiny bf16 tables (exact single-pass MXU gather); cutoff
    # kept low so v5e's 197 TF/s MXU and v6e/v7x half-wide N=128 tiles never
    # lose to the DMA path.
    d_pad = _round_up(embedding_dim, 128)
    table_bytes = num_embeddings * d_pad * dsize
    use_resident = (weight.dtype == jnp.bfloat16
                    and num_embeddings <= 256
                    and table_bytes <= budget_cap // 8)

    if use_resident:
        w = weight if d_pad == embedding_dim else jnp.pad(
            weight, ((0, 0), (0, d_pad - embedding_dim)))
        need = (2 * table_bytes                       # (double-buffered) table
                + 2 * tile_t * d_pad * dsize          # output blocks
                + 2 * tile_t * 4                      # idx blocks
                + tile_t * num_embeddings * dsize     # one-hot selector
                + tile_t * d_pad * 4)                 # f32 matmul result
        vmem_limit = int(min(budget_cap, max(2 * need, 16 * 2**20)))
        out = _resident_lookup(idx_padded, w, tile_t, vmem_limit)
        out = out[:n_tokens, :embedding_dim]
    else:
        # Un-padded weight stays in HBM; rows DMA'd straight into the output.
        need = 2 * tile_t * embedding_dim * dsize + 8 * tile_t
        vmem_limit = int(min(budget_cap, max(2 * need, 16 * 2**20)))
        out = _hbm_gather_lookup(idx_padded, weight, tile_t, n_tokens, vmem_limit)
        out = out[:n_tokens, :]

    return out.reshape(orig_shape + (embedding_dim,))


if __name__ == "__main__":
    key = jax.random.PRNGKey(0)
    k1, k2, k3, k4, k5, k6 = jax.random.split(key, 6)

    # --- Case 1: tiny bf16 vocab -> VMEM-resident one-hot MXU path (exact) ---
    V1, D1, B1, S1 = 32, 128, 2, 8
    w1 = jax.random.normal(k1, (V1, D1), dtype=jnp.bfloat16)
    idx1 = jax.random.randint(k2, (B1, S1), minval=0, maxval=V1, dtype=jnp.int32)
    out1 = jax.block_until_ready(embedding_lookup(idx1, w1))
    ref1 = w1[idx1]
    assert out1.shape == (B1, S1, D1), out1.shape
    assert jnp.array_equal(out1, ref1), "resident MXU path mismatch"

    # --- Case 2: f32 table -> HBM row-DMA gather path (un-padded weight,
    #             direct-to-output DMAs, pad rows of the last tile skipped) ---
    V2, D2 = 2048, 256
    w2 = jax.random.normal(k3, (V2, D2), dtype=jnp.float32)
    idx2 = jax.random.randint(k4, (3, 50), minval=0, maxval=V2, dtype=jnp.int32)
    out2 = jax.block_until_ready(embedding_lookup(idx2, w2))
    ref2 = w2[idx2]
    assert out2.shape == (3, 50, D2), out2.shape
    assert jnp.array_equal(out2, ref2), "HBM gather path mismatch"

    # --- Case 3: multi-tile grid with a partially filled last tile ---
    V3, D3 = 512, 128
    w3 = jax.random.normal(k5, (V3, D3), dtype=jnp.float32)
    idx3 = jax.random.randint(k6, (2, 160), minval=0, maxval=V3, dtype=jnp.int32)
    out3 = jax.block_until_ready(embedding_lookup(idx3, w3))
    ref3 = w3[idx3]
    assert out3.shape == (2, 160, D3), out3.shape
    assert jnp.array_equal(out3, ref3), "multi-tile gather mismatch"

    print("KERNEL_OK")
</pallas_src>

<mosaic_0001>
module attributes {stable_mosaic.version = 11 : i64} {
  func.func @_resident_kernel(%arg0: i32, %arg1: memref<16x1xi32, #tpu.memory_space<vmem>>, %arg2: memref<32x128xbf16, #tpu.memory_space<vmem>>, %arg3: memref<16x128xbf16, #tpu.memory_space<vmem>>) attributes {dimension_semantics = [#tpu.dimension_semantics<parallel>], iteration_bounds = array<i64: 1>, scalar_prefetch = 0 : i64, scratch_operands = 0 : i64, tpu.core_type = #tpu.core_type<tc>, window_params = [{transform_indices = @transform_0, window_bounds = array<i64: 16, 1>}, {pipeline_mode = #tpu.pipeline_mode<synchronous>, transform_indices = @transform_1, window_bounds = array<i64: 32, 128>}, {transform_indices = @transform_2, window_bounds = array<i64: 16, 128>}]} {
    %c0 = arith.constant 0 : index
    %c0_0 = arith.constant 0 : index
    %0 = vector.load %arg1[%c0, %c0_0] : memref<16x1xi32, #tpu.memory_space<vmem>>, vector<16x1xi32>
    %1 = tpu.iota {dimensions = array<i32: 1>} : vector<16x32xi32>
    %2 = vector.broadcast %0 : vector<16x1xi32> to vector<16x32xi32>
    %3 = arith.cmpi eq, %2, %1 : vector<16x32xi32>
    %4 = arith.extui %3 : vector<16x32xi1> to vector<16x32xi32>
    %5 = arith.sitofp %4 : vector<16x32xi32> to vector<16x32xf32>
    %6 = arith.truncf %5 : vector<16x32xf32> to vector<16x32xbf16>
    %c0_1 = arith.constant 0 : index
    %c0_2 = arith.constant 0 : index
    %7 = vector.load %arg2[%c0_1, %c0_2] : memref<32x128xbf16, #tpu.memory_space<vmem>>, vector<32x128xbf16>
    %cst = arith.constant dense<0.000000e+00> : vector<16x128xf32>
    %8 = tpu.matmul %6, %7, %cst {dimension_numbers = #tpu.dot_dimension_numbers<[1], [0], [0], [1], [0, 0, 1, 1], [], []>} : vector<16x32xbf16>, vector<32x128xbf16>, vector<16x128xf32> -> vector<16x128xf32>
    %9 = arith.truncf %8 : vector<16x128xf32> to vector<16x128xbf16>
    %c0_3 = arith.constant 0 : index
    %c0_4 = arith.constant 0 : index
    %10 = vector.load %arg3[%c0_3, %c0_4] : memref<16x128xbf16, #tpu.memory_space<vmem>>, vector<16x128xbf16>
    tpu.vector_store %arg3[%c0_3, %c0_4], %9 {strides = array<i32>} : memref<16x128xbf16, #tpu.memory_space<vmem>>, vector<16x128xbf16>,
    return
  }
  func.func @transform_0(%arg0: i32) -> (i32, i32) {
    %c0_i32 = arith.constant 0 : i32
    %c0_i32_0 = arith.constant 0 : i32
    return %arg0, %c0_i32 : i32, i32
  }
  func.func @transform_1(%arg0: i32) -> (i32, i32) {
    %c0_i32 = arith.constant 0 : i32
    %c0_i32_0 = arith.constant 0 : i32
    %c0_i32_1 = arith.constant 0 : i32
    return %c0_i32, %c0_i32_0 : i32, i32
  }
  func.func @transform_2(%arg0: i32) -> (i32, i32) {
    %c0_i32 = arith.constant 0 : i32
    %c0_i32_0 = arith.constant 0 : i32
    return %arg0, %c0_i32 : i32, i32
  }
}

</mosaic_0001>

<llo_original>
// kernel: tpu_custom_call.1
$region0: #{tpu_custom_call.1}
  #allocation0 [shape = 'u32[]', space=smem, size = 0x4, offset = 0x4, fixed_abs, tag = 'smem constant byte address 0x4 - core index']
  #allocation1 [shape = 'u32[72,128]{1,0:T(1,128)}', space=vmem, size = 0x9000, scoped, tag = 'internal scratch']
  %s0 = inlined_call_operand.vmem [shape: s32[16,1], index: 0, kind: input, shape index: {}]
  %s1 = inlined_call_operand.vmem [shape: bf16[32,128], index: 1, kind: input, shape index: {}]
  %s2 = inlined_call_operand.hbm [shape: bf16[16,128], index: 2, kind: output, shape index: {}]
  %s3 = sld [smem:[#allocation0]]
  $region18: #{tpu_custom_call.1} parent=0
    _
  %s5 = ssub.s32 1, %s3
  %s6 = scalar_select 0, %s5, %s3
  $region1: #{tpu_custom_call.1} parent=0
    #allocation2 [shape = 'u8[4096]{0}', space=vmem, size = 0x1000, scoped, tag = 'output window, operand 0, single buffered']
    #allocation3 [shape = 's32[1]{0}', space=sflag, size = 0x4, scoped, tag = 'scoped memory for tpu_custom_call.1']
    %7 = vsyncpa [#allocation3], 0
    // Predicated region
    $region2: #{tpu_custom_call.1} parent=1 // pred_check
      _
    $region3: #{tpu_custom_call.1} parent=1 // pred_check_branch
      %9 = sbr.rel (0) target = $region5
    $region4: #{tpu_custom_call.1} parent=1 // pred_region
      _
    $region5: #{tpu_custom_call.1} parent=1 // pred_fallthru
      _
    // Predicated region
    $region6: #{tpu_custom_call.1} parent=1 // pred_check
      _
    $region7: #{tpu_custom_call.1} parent=1 // pred_check_branch
      %11 = sbr.rel (0) target = $region9
    $region8: #{tpu_custom_call.1} parent=1 // pred_region
      _
    $region9: #{tpu_custom_call.1} parent=1 // pred_fallthru
      _
    %v13 = vld [vmem:[%s0] sm:$0xff]
    %v14 = vld [vmem:[%s0 + $0x8] sm:$0xff]
    %v15 = vlaneseq
    %v16 = vand.u32 %v15, 127
    %17 = vset.pattern.permute.xlu0 0
    %18 = vperm.xlu0 %17, %v13
    %v19 = vpop.permute.xlu0 %18
    %20 = vset.pattern.permute.xlu0 0
    %21 = vperm.xlu0 %20, %v14
    %v22 = vpop.permute.xlu0 %21
    %vm23 = vcmp.eq.s32.totalorder %v19, %v16
    %vm24 = vcmp.eq.s32.totalorder %v22, %v16
    %v25 = vsel %vm23, 1, 0
    %v26 = vsel %vm24, 1, 0
    %v27 = vcvt.s32.f32 %v25
    %v28 = vcvt.s32.f32 %v26
    %v29 = vpack.c.bf16 %v28, %v27
    %v30 = vld [vmem:[%s1] sm:$0xf]
    %v31 = vld [vmem:[%s1 + $0x4] sm:$0xf]
    %v32 = vld [vmem:[%s1 + $0x8] sm:$0xf]
    %v33 = vld [vmem:[%s1 + $0xc] sm:$0xf]
    %v38 = vunpack.c.l.b16 %v30
    %v39 = vunpack.c.l.b16 %v31
    %v40 = vunpack.c.l.b16 %v32
    %v41 = vunpack.c.l.b16 %v33
    %v42 = vpack.c.b16 %v39, %v38
    %v43 = vpack.c.b16 %v41, %v40
    %vm46 = vcmask 261120
    %v48 = vsel %vm46, %v29, 0
    %50 = vmatpush.bf16.msra.mxu0 0
    %51 = vmatpush.bf16.msra.mxu0 0
    %52 = vmatpush.bf16.msra.mxu0 0
    %53 = vmatpush.bf16.msra.mxu0 0
    %54 = vmatpush.bf16.msra.mxu0 0
    %55 = vmatpush.bf16.msra.mxu0 0
    %56 = vmatpush.bf16.msra.mxu0 %v43
    %57 = vmatpush.bf16.msra.mxu0 %v42
    %58 = vmatmul.bf16.gmra.mxu0 %v48
    %v59 = vpop.f32.mrf.mxu0
    %v60 = vadd.f32 0.0, %v59
    %v61 = vpop.f32.mrf.mxu0
    %v62 = vadd.f32 0.0, %v61
    %63 = vdwg.mxu0
    %v64 = vpack.c.bf16 %v60, %v60
    %v65 = vpack.c.bf16 %v62, %v62
    %66 = vst [vmem:[#allocation2] sm:$0xf] %v64
    %67 = vst [vmem:[#allocation2 + $0x4] sm:$0xf] %v65
    // Predicated region
    $region10: #{tpu_custom_call.1} parent=1 // pred_check
      _
    $region11: #{tpu_custom_call.1} parent=1 // pred_check_branch
      %69 = sbr.rel (0) target = $region13
    $region12: #{tpu_custom_call.1} parent=1 // pred_region
      %71 = vsyncadd [#allocation3], 0
      %s72 = sshll.u32 [#allocation2], 4
      %s73 = int_to_ptr.vmem [resolvable:$true] %s72
      %s74 = sshll.u32 %s2, 4
      %s75 = int_to_ptr.hbm [resolvable:$true] %s74
      %80 = dma.vmem_to_hbm [thread:$0]  %s73, 128, %s75, [#allocation3], 64, 64, 4
    $region13: #{tpu_custom_call.1} parent=1 // pred_fallthru
      _
    // Predicated region
    $region14: #{tpu_custom_call.1} parent=1 // pred_check
      _
    $region15: #{tpu_custom_call.1} parent=1 // pred_check_branch
      %82 = sbr.rel (0) target = $region17
    $region16: #{tpu_custom_call.1} parent=1 // pred_region
      %84 = dma.done [#allocation3], 128
    $region17: #{tpu_custom_call.1} parent=1 // pred_fallthru
      _
    %85 = vsyncpa [#allocation3], 1

</llo_original>
